<compile_context>
chip_gen: v5e
topology: v5e:2x2
jax: 0.10.0
libtpu: 0.0.40
codegen_flags: <defaults>
</compile_context>

<pallas_src>
import jax
import jax.numpy as jnp
from jax import lax
from jax.experimental import pallas as pl
from jax.experimental.pallas import tpu as pltpu


def _make_fused_tcn_kernel(T, n_words, dilations, has_down, layer_meta,
                           dec_ofs, dec_rows, dec_b_idx, out_dim):
    """Fused kernel body.  Refs: tok, emb, w_blob, b_blob, out."""

    def kernel(tok_ref, emb_ref, w_ref, b_ref, o_ref):
        BT = tok_ref.shape[0]

        # ---- embedding lookup fused as a bf16 one-hot matmul (gather-free) ----
        tok = tok_ref[...]                                          # (BT, 1) i32
        vocab = lax.broadcasted_iota(jnp.int32, (BT, n_words), 1)   # (BT, V)
        onehot = (vocab == tok).astype(jnp.bfloat16)                # exact 0/1
        x = jnp.dot(onehot, emb_ref[...],
                    preferred_element_type=jnp.float32)             # (BT, E) f32

        # ---- in-kernel time-within-sequence index (row-major (B,T) flatten) ----
        row = lax.broadcasted_iota(jnp.int32, (BT, 1), 0)
        if (T & (T - 1)) == 0:
            t_in_seq = row & (T - 1)
        else:
            t_in_seq = row % T

        for li, meta in enumerate(layer_meta):
            d = dilations[li]
            keep = t_in_seq >= d          # one mask per layer, reused by both convs
            cin, cout = meta["cin"], meta["cout"]

            def conv(v, ofs, cin_, cout_, b_idx, d=d, keep=keep):
                # k=2 dilated causal conv as two sublane-aligned MXU pushes from
                # the packed weight blob: rows [ofs:ofs+cin_) act on x[t-d],
                # rows [ofs+cin_:ofs+2*cin_) on x[t].  bf16 operands, f32 acc.
                sb = jnp.where(keep, pltpu.roll(v, shift=d, axis=0), 0.0)
                y = (jnp.dot(sb.astype(jnp.bfloat16),
                             w_ref[ofs:ofs + cin_, 0:cout_],
                             preferred_element_type=jnp.float32)
                     + jnp.dot(v.astype(jnp.bfloat16),
                               w_ref[ofs + cin_:ofs + 2 * cin_, 0:cout_],
                               preferred_element_type=jnp.float32)
                     + b_ref[b_idx:b_idx + 1, 0:cout_])
                return jnp.maximum(y, 0.0)

            y1 = conv(x, meta["w1_ofs"], cin, cout, meta["b1_idx"])
            y2 = conv(y1, meta["w2_ofs"], cout, cout, meta["b2_idx"])

            # residual branch (1x1 conv downsample iff Cin != Cout), f32 add
            if has_down[li]:
                wd_ofs = meta["wd_ofs"]
                res = (jnp.dot(x.astype(jnp.bfloat16),
                               w_ref[wd_ofs:wd_ofs + cin, 0:cout],
                               preferred_element_type=jnp.float32)
                       + b_ref[meta["bd_idx"]:meta["bd_idx"] + 1, 0:cout])
            else:
                res = x
            x = jnp.maximum(y2 + res, 0.0)

        # ---- decoder: Linear(hidden -> 32) ----
        o_ref[...] = (jnp.dot(x.astype(jnp.bfloat16),
                              w_ref[dec_ofs:dec_ofs + dec_rows, 0:out_dim],
                              preferred_element_type=jnp.float32)
                      + b_ref[dec_b_idx:dec_b_idx + 1, 0:out_dim])

    return kernel


def make_text_encoder_tcn(params):
    """One-time fold of raw per-tap weights into the packed-blob layout, then
    return a jitted forward(tokens) -> (y, 0)."""
    n_layers = len(params["blocks"])
    dilations = tuple(2 ** i for i in range(n_layers))
    has_down = tuple("wd" in p for p in params["blocks"])

    # --- pack every matmul weight into one bf16 blob, every bias into one f32 blob ---
    w_mats, b_rows, layer_meta = [], [], []
    row, bidx = 0, 0
    for p in params["blocks"]:
        cin, cout = p["w10"].shape
        meta = {"cin": cin, "cout": cout}
        meta["w1_ofs"] = row
        w_mats.append(jnp.concatenate([p["w10"], p["w11"]], axis=0)); row += 2 * cin
        meta["b1_idx"] = bidx; b_rows.append(p["b1"]); bidx += 1
        meta["w2_ofs"] = row
        w_mats.append(jnp.concatenate([p["w20"], p["w21"]], axis=0)); row += 2 * cout
        meta["b2_idx"] = bidx; b_rows.append(p["b2"]); bidx += 1
        if "wd" in p:
            meta["wd_ofs"] = row
            w_mats.append(p["wd"]); row += cin
            meta["bd_idx"] = bidx; b_rows.append(p["bd"]); bidx += 1
        layer_meta.append(meta)
    dec_ofs, dec_rows = row, params["dec_w"].shape[0]
    out_dim = params["dec_w"].shape[1]
    w_mats.append(params["dec_w"]); row += dec_rows
    dec_b_idx = bidx; b_rows.append(params["dec_b"]); bidx += 1

    max_cols = max(m.shape[1] for m in w_mats)
    w_blob = jnp.concatenate(
        [jnp.pad(m, ((0, 0), (0, max_cols - m.shape[1]))) for m in w_mats],
        axis=0).astype(jnp.bfloat16)                         # (496, 32) bf16 here
    b_blob = jnp.concatenate(
        [jnp.pad(b, ((0, 0), (0, max_cols - b.shape[1]))) for b in b_rows],
        axis=0).astype(jnp.float32)                          # (8, 32) f32 here

    emb = params["embedding"].astype(jnp.bfloat16)           # bf16 table (review)
    n_words = emb.shape[0]

    @jax.jit
    def forward(tokens):
        B, T = tokens.shape
        BT = B * T
        # Row-major (B, T) flatten -- the in-kernel iota%T mask depends on this.
        tok = tokens.reshape(BT, 1).astype(jnp.int32)

        kernel = _make_fused_tcn_kernel(T, n_words, dilations, has_down,
                                        layer_meta, dec_ofs, dec_rows,
                                        dec_b_idx, out_dim)
        vmem_spec = lambda: pl.BlockSpec(memory_space=pltpu.MemorySpace.VMEM)
        y = pl.pallas_call(
            kernel,
            out_shape=jax.ShapeDtypeStruct((BT, out_dim), jnp.float32),
            in_specs=[vmem_spec() for _ in range(4)],
            out_specs=vmem_spec(),
        )(tok, emb, w_blob, b_blob)
        # matches PyTorch TextEncoderTCN.forward -> (y.contiguous(), 0)
        return y.reshape(B, T, out_dim), 0

    return forward


def init_params(key, n_words, embed_size, hidden_size, n_layers, out_size=32):
    # Deterministic synthetic init mirroring TextEncoderTCN.__init__ shapes:
    #   embedding: (n_words, embed_size), N(0, 1)
    #   per TemporalBlock (k=2): taps (Cin, Cout)/(Cout, Cout), N(0, 0.01)
    #     (assumed to be the already-folded weight-norm inference weights)
    #   decoder: (hidden, 32) N(0, 0.01), bias 0 (as in init_weights)
    kit = iter(jax.random.split(key, 4 + 8 * n_layers))
    params = {"embedding": jax.random.normal(next(kit), (n_words, embed_size),
                                             jnp.float32)}
    blocks = []
    cin = embed_size
    for _ in range(n_layers):
        cout = hidden_size
        p = {
            "w10": 0.01 * jax.random.normal(next(kit), (cin, cout), jnp.float32),
            "w11": 0.01 * jax.random.normal(next(kit), (cin, cout), jnp.float32),
            "b1": 0.01 * jax.random.normal(next(kit), (1, cout), jnp.float32),
            "w20": 0.01 * jax.random.normal(next(kit), (cout, cout), jnp.float32),
            "w21": 0.01 * jax.random.normal(next(kit), (cout, cout), jnp.float32),
            "b2": 0.01 * jax.random.normal(next(kit), (1, cout), jnp.float32),
        }
        if cin != cout:
            p["wd"] = 0.01 * jax.random.normal(next(kit), (cin, cout), jnp.float32)
            p["bd"] = 0.01 * jax.random.normal(next(kit), (1, cout), jnp.float32)
        blocks.append(p)
        cin = cout
    params["blocks"] = blocks
    params["dec_w"] = 0.01 * jax.random.normal(next(kit), (hidden_size, out_size),
                                               jnp.float32)
    params["dec_b"] = jnp.zeros((1, out_size), jnp.float32)
    return params


def ref_forward(params, tokens):
    # Pure-JAX f32 reference of the same math (PyTorch tap convention).
    emb = jnp.take(params["embedding"], tokens, axis=0)
    x = emb
    for i, p in enumerate(params["blocks"]):
        d = 2 ** i

        def shift(v, d=d):
            return jnp.pad(v, ((0, 0), (d, 0), (0, 0)))[:, :v.shape[1], :]

        y1 = jnp.maximum(shift(x) @ p["w10"] + x @ p["w11"] + p["b1"], 0.0)
        y2 = jnp.maximum(shift(y1) @ p["w20"] + y1 @ p["w21"] + p["b2"], 0.0)
        res = x @ p["wd"] + p["bd"] if "wd" in p else x
        x = jnp.maximum(y2 + res, 0.0)
    return x @ params["dec_w"] + params["dec_b"]


if __name__ == "__main__":
    key = jax.random.PRNGKey(0)
    pk, tk = jax.random.split(key)
    # small shapes: args.hidden_size=32, args.n_layers=3, embed_size=48,
    # n_words=100, kernel_size=2; batch=2, seq=16
    n_words, embed_size, hidden_size, n_layers = 100, 48, 32, 3
    B, T = 2, 16
    params = init_params(pk, n_words, embed_size, hidden_size, n_layers)
    tokens = jax.random.randint(tk, (B, T), 0, n_words, dtype=jnp.int32)

    forward = make_text_encoder_tcn(params)
    y, aux = forward(tokens)
    y = jax.block_until_ready(y)

    y_ref = ref_forward(params, tokens)
    assert y.shape == (B, T, 32) and aux == 0
    err = float(jnp.max(jnp.abs(y - y_ref)))
    # bf16 MXU operands + bf16 embedding table (f32 accumulation) vs f32
    # reference -> relaxed tolerance (table adds ~2^-8 relative rounding).
    assert jnp.allclose(y, y_ref, atol=2e-3, rtol=2e-2), err
    print("KERNEL_OK")
</pallas_src>

<mosaic_0001>
module attributes {stable_mosaic.version = 11 : i64} {
  func.func @kernel(%arg0: memref<32x1xi32, #tpu.memory_space<vmem>>, %arg1: memref<100x48xbf16, #tpu.memory_space<vmem>>, %arg2: memref<496x32xbf16, #tpu.memory_space<vmem>>, %arg3: memref<8x32xf32, #tpu.memory_space<vmem>>, %arg4: memref<32x32xf32, #tpu.memory_space<vmem>>) attributes {dimension_semantics = [], scalar_prefetch = 0 : i64, scratch_operands = 0 : i64, tpu.core_type = #tpu.core_type<tc>} {
    %c0 = arith.constant 0 : index
    %c0_0 = arith.constant 0 : index
    %0 = vector.load %arg0[%c0, %c0_0] : memref<32x1xi32, #tpu.memory_space<vmem>>, vector<32x1xi32>
    %1 = tpu.iota {dimensions = array<i32: 1>} : vector<32x100xi32>
    %2 = vector.broadcast %0 : vector<32x1xi32> to vector<32x100xi32>
    %3 = arith.cmpi eq, %1, %2 : vector<32x100xi32>
    %4 = arith.extui %3 : vector<32x100xi1> to vector<32x100xi32>
    %5 = arith.sitofp %4 : vector<32x100xi32> to vector<32x100xf32>
    %6 = arith.truncf %5 : vector<32x100xf32> to vector<32x100xbf16>
    %c0_1 = arith.constant 0 : index
    %c0_2 = arith.constant 0 : index
    %7 = vector.load %arg1[%c0_1, %c0_2] : memref<100x48xbf16, #tpu.memory_space<vmem>>, vector<100x48xbf16>
    %cst = arith.constant dense<0.000000e+00> : vector<32x48xf32>
    %8 = tpu.matmul %6, %7, %cst {dimension_numbers = #tpu.dot_dimension_numbers<[1], [0], [0], [1], [0, 0, 1, 1], [], []>} : vector<32x100xbf16>, vector<100x48xbf16>, vector<32x48xf32> -> vector<32x48xf32>
    %9 = tpu.iota {dimensions = array<i32: 0>} : vector<32x1xi32>
    %c15_i32 = arith.constant 15 : i32
    %10 = vector.broadcast %c15_i32 : i32 to vector<32x1xi32>
    %11 = arith.andi %9, %10 : vector<32x1xi32>
    %c1_i32 = arith.constant 1 : i32
    %12 = vector.broadcast %c1_i32 : i32 to vector<32x1xi32>
    %13 = arith.cmpi sge, %11, %12 : vector<32x1xi32>
    %c1_i32_3 = arith.constant 1 : i32
    %14 = tpu.dynamic_rotate %8 by %c1_i32_3 dim 0 : vector<32x48xf32>, i32 -> vector<32x48xf32>
    %cst_4 = arith.constant 0.000000e+00 : f32
    %15 = vector.shape_cast %13 : vector<32x1xi1> to vector<32x1xi1>
    %16 = vector.broadcast %15 : vector<32x1xi1> to vector<32x48xi1>
    %17 = vector.broadcast %cst_4 : f32 to vector<32x48xf32>
    %18 = arith.select %16, %14, %17 : vector<32x48xi1>, vector<32x48xf32>
    %19 = arith.truncf %18 : vector<32x48xf32> to vector<32x48xbf16>
    %c0_5 = arith.constant 0 : index
    %c0_6 = arith.constant 0 : index
    %20 = vector.load %arg2[%c0_5, %c0_6] : memref<496x32xbf16, #tpu.memory_space<vmem>>, vector<48x32xbf16>
    %cst_7 = arith.constant dense<0.000000e+00> : vector<32x32xf32>
    %21 = tpu.matmul %19, %20, %cst_7 {dimension_numbers = #tpu.dot_dimension_numbers<[1], [0], [0], [1], [0, 0, 1, 1], [], []>} : vector<32x48xbf16>, vector<48x32xbf16>, vector<32x32xf32> -> vector<32x32xf32>
    %22 = arith.truncf %8 : vector<32x48xf32> to vector<32x48xbf16>
    %c48 = arith.constant 48 : index
    %c0_8 = arith.constant 0 : index
    %23 = vector.load %arg2[%c48, %c0_8] : memref<496x32xbf16, #tpu.memory_space<vmem>>, vector<48x32xbf16>
    %cst_9 = arith.constant dense<0.000000e+00> : vector<32x32xf32>
    %24 = tpu.matmul %22, %23, %cst_9 {dimension_numbers = #tpu.dot_dimension_numbers<[1], [0], [0], [1], [0, 0, 1, 1], [], []>} : vector<32x48xbf16>, vector<48x32xbf16>, vector<32x32xf32> -> vector<32x32xf32>
    %25 = arith.addf %21, %24 : vector<32x32xf32>
    %c0_10 = arith.constant 0 : index
    %c0_11 = arith.constant 0 : index
    %26 = vector.load %arg3[%c0_10, %c0_11] : memref<8x32xf32, #tpu.memory_space<vmem>>, vector<1x32xf32>
    %27 = vector.broadcast %26 : vector<1x32xf32> to vector<32x32xf32>
    %28 = arith.addf %25, %27 : vector<32x32xf32>
    %cst_12 = arith.constant 0.000000e+00 : f32
    %29 = vector.broadcast %cst_12 : f32 to vector<32x32xf32>
    %30 = arith.maximumf %28, %29 : vector<32x32xf32>
    %c1_i32_13 = arith.constant 1 : i32
    %31 = tpu.dynamic_rotate %30 by %c1_i32_13 dim 0 : vector<32x32xf32>, i32 -> vector<32x32xf32>
    %cst_14 = arith.constant 0.000000e+00 : f32
    %32 = vector.shape_cast %13 : vector<32x1xi1> to vector<32x1xi1>
    %33 = vector.broadcast %32 : vector<32x1xi1> to vector<32x32xi1>
    %34 = vector.broadcast %cst_14 : f32 to vector<32x32xf32>
    %35 = arith.select %33, %31, %34 : vector<32x32xi1>, vector<32x32xf32>
    %36 = arith.truncf %35 : vector<32x32xf32> to vector<32x32xbf16>
    %c96 = arith.constant 96 : index
    %c0_15 = arith.constant 0 : index
    %37 = vector.load %arg2[%c96, %c0_15] : memref<496x32xbf16, #tpu.memory_space<vmem>>, vector<32x32xbf16>
    %cst_16 = arith.constant dense<0.000000e+00> : vector<32x32xf32>
    %38 = tpu.matmul %36, %37, %cst_16 {dimension_numbers = #tpu.dot_dimension_numbers<[1], [0], [0], [1], [0, 0, 1, 1], [], []>} : vector<32x32xbf16>, vector<32x32xbf16>, vector<32x32xf32> -> vector<32x32xf32>
    %39 = arith.truncf %30 : vector<32x32xf32> to vector<32x32xbf16>
    %c128 = arith.constant 128 : index
    %c0_17 = arith.constant 0 : index
    %40 = vector.load %arg2[%c128, %c0_17] : memref<496x32xbf16, #tpu.memory_space<vmem>>, vector<32x32xbf16>
    %cst_18 = arith.constant dense<0.000000e+00> : vector<32x32xf32>
    %41 = tpu.matmul %39, %40, %cst_18 {dimension_numbers = #tpu.dot_dimension_numbers<[1], [0], [0], [1], [0, 0, 1, 1], [], []>} : vector<32x32xbf16>, vector<32x32xbf16>, vector<32x32xf32> -> vector<32x32xf32>
    %42 = arith.addf %38, %41 : vector<32x32xf32>
    %c1 = arith.constant 1 : index
    %c0_19 = arith.constant 0 : index
    %43 = vector.load %arg3[%c1, %c0_19] : memref<8x32xf32, #tpu.memory_space<vmem>>, vector<1x32xf32>
    %44 = vector.broadcast %43 : vector<1x32xf32> to vector<32x32xf32>
    %45 = arith.addf %42, %44 : vector<32x32xf32>
    %cst_20 = arith.constant 0.000000e+00 : f32
    %46 = vector.broadcast %cst_20 : f32 to vector<32x32xf32>
    %47 = arith.maximumf %45, %46 : vector<32x32xf32>
    %48 = arith.truncf %8 : vector<32x48xf32> to vector<32x48xbf16>
    %c160 = arith.constant 160 : index
    %c0_21 = arith.constant 0 : index
    %49 = vector.load %arg2[%c160, %c0_21] : memref<496x32xbf16, #tpu.memory_space<vmem>>, vector<48x32xbf16>
    %cst_22 = arith.constant dense<0.000000e+00> : vector<32x32xf32>
    %50 = tpu.matmul %48, %49, %cst_22 {dimension_numbers = #tpu.dot_dimension_numbers<[1], [0], [0], [1], [0, 0, 1, 1], [], []>} : vector<32x48xbf16>, vector<48x32xbf16>, vector<32x32xf32> -> vector<32x32xf32>
    %c2 = arith.constant 2 : index
    %c0_23 = arith.constant 0 : index
    %51 = vector.load %arg3[%c2, %c0_23] : memref<8x32xf32, #tpu.memory_space<vmem>>, vector<1x32xf32>
    %52 = vector.broadcast %51 : vector<1x32xf32> to vector<32x32xf32>
    %53 = arith.addf %50, %52 : vector<32x32xf32>
    %54 = arith.addf %47, %53 : vector<32x32xf32>
    %cst_24 = arith.constant 0.000000e+00 : f32
    %55 = vector.broadcast %cst_24 : f32 to vector<32x32xf32>
    %56 = arith.maximumf %54, %55 : vector<32x32xf32>
    %c2_i32 = arith.constant 2 : i32
    %57 = vector.broadcast %c2_i32 : i32 to vector<32x1xi32>
    %58 = arith.cmpi sge, %11, %57 : vector<32x1xi32>
    %c2_i32_25 = arith.constant 2 : i32
    %59 = tpu.dynamic_rotate %56 by %c2_i32_25 dim 0 : vector<32x32xf32>, i32 -> vector<32x32xf32>
    %cst_26 = arith.constant 0.000000e+00 : f32
    %60 = vector.shape_cast %58 : vector<32x1xi1> to vector<32x1xi1>
    %61 = vector.broadcast %60 : vector<32x1xi1> to vector<32x32xi1>
    %62 = vector.broadcast %cst_26 : f32 to vector<32x32xf32>
    %63 = arith.select %61, %59, %62 : vector<32x32xi1>, vector<32x32xf32>
    %64 = arith.truncf %63 : vector<32x32xf32> to vector<32x32xbf16>
    %c208 = arith.constant 208 : index
    %c0_27 = arith.constant 0 : index
    %65 = vector.load %arg2[%c208, %c0_27] : memref<496x32xbf16, #tpu.memory_space<vmem>>, vector<32x32xbf16>
    %cst_28 = arith.constant dense<0.000000e+00> : vector<32x32xf32>
    %66 = tpu.matmul %64, %65, %cst_28 {dimension_numbers = #tpu.dot_dimension_numbers<[1], [0], [0], [1], [0, 0, 1, 1], [], []>} : vector<32x32xbf16>, vector<32x32xbf16>, vector<32x32xf32> -> vector<32x32xf32>
    %67 = arith.truncf %56 : vector<32x32xf32> to vector<32x32xbf16>
    %c240 = arith.constant 240 : index
    %c0_29 = arith.constant 0 : index
    %68 = vector.load %arg2[%c240, %c0_29] : memref<496x32xbf16, #tpu.memory_space<vmem>>, vector<32x32xbf16>
    %cst_30 = arith.constant dense<0.000000e+00> : vector<32x32xf32>
    %69 = tpu.matmul %67, %68, %cst_30 {dimension_numbers = #tpu.dot_dimension_numbers<[1], [0], [0], [1], [0, 0, 1, 1], [], []>} : vector<32x32xbf16>, vector<32x32xbf16>, vector<32x32xf32> -> vector<32x32xf32>
    %70 = arith.addf %66, %69 : vector<32x32xf32>
    %c3 = arith.constant 3 : index
    %c0_31 = arith.constant 0 : index
    %71 = vector.load %arg3[%c3, %c0_31] : memref<8x32xf32, #tpu.memory_space<vmem>>, vector<1x32xf32>
    %72 = vector.broadcast %71 : vector<1x32xf32> to vector<32x32xf32>
    %73 = arith.addf %70, %72 : vector<32x32xf32>
    %cst_32 = arith.constant 0.000000e+00 : f32
    %74 = vector.broadcast %cst_32 : f32 to vector<32x32xf32>
    %75 = arith.maximumf %73, %74 : vector<32x32xf32>
    %c2_i32_33 = arith.constant 2 : i32
    %76 = tpu.dynamic_rotate %75 by %c2_i32_33 dim 0 : vector<32x32xf32>, i32 -> vector<32x32xf32>
    %cst_34 = arith.constant 0.000000e+00 : f32
    %77 = vector.shape_cast %58 : vector<32x1xi1> to vector<32x1xi1>
    %78 = vector.broadcast %77 : vector<32x1xi1> to vector<32x32xi1>
    %79 = vector.broadcast %cst_34 : f32 to vector<32x32xf32>
    %80 = arith.select %78, %76, %79 : vector<32x32xi1>, vector<32x32xf32>
    %81 = arith.truncf %80 : vector<32x32xf32> to vector<32x32xbf16>
    %c272 = arith.constant 272 : index
    %c0_35 = arith.constant 0 : index
    %82 = vector.load %arg2[%c272, %c0_35] : memref<496x32xbf16, #tpu.memory_space<vmem>>, vector<32x32xbf16>
    %cst_36 = arith.constant dense<0.000000e+00> : vector<32x32xf32>
    %83 = tpu.matmul %81, %82, %cst_36 {dimension_numbers = #tpu.dot_dimension_numbers<[1], [0], [0], [1], [0, 0, 1, 1], [], []>} : vector<32x32xbf16>, vector<32x32xbf16>, vector<32x32xf32> -> vector<32x32xf32>
    %84 = arith.truncf %75 : vector<32x32xf32> to vector<32x32xbf16>
    %c304 = arith.constant 304 : index
    %c0_37 = arith.constant 0 : index
    %85 = vector.load %arg2[%c304, %c0_37] : memref<496x32xbf16, #tpu.memory_space<vmem>>, vector<32x32xbf16>
    %cst_38 = arith.constant dense<0.000000e+00> : vector<32x32xf32>
    %86 = tpu.matmul %84, %85, %cst_38 {dimension_numbers = #tpu.dot_dimension_numbers<[1], [0], [0], [1], [0, 0, 1, 1], [], []>} : vector<32x32xbf16>, vector<32x32xbf16>, vector<32x32xf32> -> vector<32x32xf32>
    %87 = arith.addf %83, %86 : vector<32x32xf32>
    %c4 = arith.constant 4 : index
    %c0_39 = arith.constant 0 : index
    %88 = vector.load %arg3[%c4, %c0_39] : memref<8x32xf32, #tpu.memory_space<vmem>>, vector<1x32xf32>
    %89 = vector.broadcast %88 : vector<1x32xf32> to vector<32x32xf32>
    %90 = arith.addf %87, %89 : vector<32x32xf32>
    %cst_40 = arith.constant 0.000000e+00 : f32
    %91 = vector.broadcast %cst_40 : f32 to vector<32x32xf32>
    %92 = arith.maximumf %90, %91 : vector<32x32xf32>
    %93 = arith.addf %92, %56 : vector<32x32xf32>
    %cst_41 = arith.constant 0.000000e+00 : f32
    %94 = vector.broadcast %cst_41 : f32 to vector<32x32xf32>
    %95 = arith.maximumf %93, %94 : vector<32x32xf32>
    %c4_i32 = arith.constant 4 : i32
    %96 = vector.broadcast %c4_i32 : i32 to vector<32x1xi32>
    %97 = arith.cmpi sge, %11, %96 : vector<32x1xi32>
    %c4_i32_42 = arith.constant 4 : i32
    %98 = tpu.dynamic_rotate %95 by %c4_i32_42 dim 0 : vector<32x32xf32>, i32 -> vector<32x32xf32>
    %cst_43 = arith.constant 0.000000e+00 : f32
    %99 = vector.shape_cast %97 : vector<32x1xi1> to vector<32x1xi1>
    %100 = vector.broadcast %99 : vector<32x1xi1> to vector<32x32xi1>
    %101 = vector.broadcast %cst_43 : f32 to vector<32x32xf32>
    %102 = arith.select %100, %98, %101 : vector<32x32xi1>, vector<32x32xf32>
    %103 = arith.truncf %102 : vector<32x32xf32> to vector<32x32xbf16>
    %c336 = arith.constant 336 : index
    %c0_44 = arith.constant 0 : index
    %104 = vector.load %arg2[%c336, %c0_44] : memref<496x32xbf16, #tpu.memory_space<vmem>>, vector<32x32xbf16>
    %cst_45 = arith.constant dense<0.000000e+00> : vector<32x32xf32>
    %105 = tpu.matmul %103, %104, %cst_45 {dimension_numbers = #tpu.dot_dimension_numbers<[1], [0], [0], [1], [0, 0, 1, 1], [], []>} : vector<32x32xbf16>, vector<32x32xbf16>, vector<32x32xf32> -> vector<32x32xf32>
    %106 = arith.truncf %95 : vector<32x32xf32> to vector<32x32xbf16>
    %c368 = arith.constant 368 : index
    %c0_46 = arith.constant 0 : index
    %107 = vector.load %arg2[%c368, %c0_46] : memref<496x32xbf16, #tpu.memory_space<vmem>>, vector<32x32xbf16>
    %cst_47 = arith.constant dense<0.000000e+00> : vector<32x32xf32>
    %108 = tpu.matmul %106, %107, %cst_47 {dimension_numbers = #tpu.dot_dimension_numbers<[1], [0], [0], [1], [0, 0, 1, 1], [], []>} : vector<32x32xbf16>, vector<32x32xbf16>, vector<32x32xf32> -> vector<32x32xf32>
    %109 = arith.addf %105, %108 : vector<32x32xf32>
    %c5 = arith.constant 5 : index
    %c0_48 = arith.constant 0 : index
    %110 = vector.load %arg3[%c5, %c0_48] : memref<8x32xf32, #tpu.memory_space<vmem>>, vector<1x32xf32>
    %111 = vector.broadcast %110 : vector<1x32xf32> to vector<32x32xf32>
    %112 = arith.addf %109, %111 : vector<32x32xf32>
    %cst_49 = arith.constant 0.000000e+00 : f32
    %113 = vector.broadcast %cst_49 : f32 to vector<32x32xf32>
    %114 = arith.maximumf %112, %113 : vector<32x32xf32>
    %c4_i32_50 = arith.constant 4 : i32
    %115 = tpu.dynamic_rotate %114 by %c4_i32_50 dim 0 : vector<32x32xf32>, i32 -> vector<32x32xf32>
    %cst_51 = arith.constant 0.000000e+00 : f32
    %116 = vector.shape_cast %97 : vector<32x1xi1> to vector<32x1xi1>
    %117 = vector.broadcast %116 : vector<32x1xi1> to vector<32x32xi1>
    %118 = vector.broadcast %cst_51 : f32 to vector<32x32xf32>
    %119 = arith.select %117, %115, %118 : vector<32x32xi1>, vector<32x32xf32>
    %120 = arith.truncf %119 : vector<32x32xf32> to vector<32x32xbf16>
    %c400 = arith.constant 400 : index
    %c0_52 = arith.constant 0 : index
    %121 = vector.load %arg2[%c400, %c0_52] : memref<496x32xbf16, #tpu.memory_space<vmem>>, vector<32x32xbf16>
    %cst_53 = arith.constant dense<0.000000e+00> : vector<32x32xf32>
    %122 = tpu.matmul %120, %121, %cst_53 {dimension_numbers = #tpu.dot_dimension_numbers<[1], [0], [0], [1], [0, 0, 1, 1], [], []>} : vector<32x32xbf16>, vector<32x32xbf16>, vector<32x32xf32> -> vector<32x32xf32>
    %123 = arith.truncf %114 : vector<32x32xf32> to vector<32x32xbf16>
    %c432 = arith.constant 432 : index
    %c0_54 = arith.constant 0 : index
    %124 = vector.load %arg2[%c432, %c0_54] : memref<496x32xbf16, #tpu.memory_space<vmem>>, vector<32x32xbf16>
    %cst_55 = arith.constant dense<0.000000e+00> : vector<32x32xf32>
    %125 = tpu.matmul %123, %124, %cst_55 {dimension_numbers = #tpu.dot_dimension_numbers<[1], [0], [0], [1], [0, 0, 1, 1], [], []>} : vector<32x32xbf16>, vector<32x32xbf16>, vector<32x32xf32> -> vector<32x32xf32>
    %126 = arith.addf %122, %125 : vector<32x32xf32>
    %c6 = arith.constant 6 : index
    %c0_56 = arith.constant 0 : index
    %127 = vector.load %arg3[%c6, %c0_56] : memref<8x32xf32, #tpu.memory_space<vmem>>, vector<1x32xf32>
    %128 = vector.broadcast %127 : vector<1x32xf32> to vector<32x32xf32>
    %129 = arith.addf %126, %128 : vector<32x32xf32>
    %cst_57 = arith.constant 0.000000e+00 : f32
    %130 = vector.broadcast %cst_57 : f32 to vector<32x32xf32>
    %131 = arith.maximumf %129, %130 : vector<32x32xf32>
    %132 = arith.addf %131, %95 : vector<32x32xf32>
    %cst_58 = arith.constant 0.000000e+00 : f32
    %133 = vector.broadcast %cst_58 : f32 to vector<32x32xf32>
    %134 = arith.maximumf %132, %133 : vector<32x32xf32>
    %135 = arith.truncf %134 : vector<32x32xf32> to vector<32x32xbf16>
    %c464 = arith.constant 464 : index
    %c0_59 = arith.constant 0 : index
    %136 = vector.load %arg2[%c464, %c0_59] : memref<496x32xbf16, #tpu.memory_space<vmem>>, vector<32x32xbf16>
    %cst_60 = arith.constant dense<0.000000e+00> : vector<32x32xf32>
    %137 = tpu.matmul %135, %136, %cst_60 {dimension_numbers = #tpu.dot_dimension_numbers<[1], [0], [0], [1], [0, 0, 1, 1], [], []>} : vector<32x32xbf16>, vector<32x32xbf16>, vector<32x32xf32> -> vector<32x32xf32>
    %c7 = arith.constant 7 : index
    %c0_61 = arith.constant 0 : index
    %138 = vector.load %arg3[%c7, %c0_61] : memref<8x32xf32, #tpu.memory_space<vmem>>, vector<1x32xf32>
    %139 = vector.broadcast %138 : vector<1x32xf32> to vector<32x32xf32>
    %140 = arith.addf %137, %139 : vector<32x32xf32>
    %c0_62 = arith.constant 0 : index
    %c0_63 = arith.constant 0 : index
    %141 = vector.load %arg4[%c0_62, %c0_63] : memref<32x32xf32, #tpu.memory_space<vmem>>, vector<32x32xf32>
    tpu.vector_store %arg4[%c0_62, %c0_63], %140 {strides = array<i32>} : memref<32x32xf32, #tpu.memory_space<vmem>>, vector<32x32xf32>,
    return
  }
}

</mosaic_0001>

<llo_original>
// kernel: forward.1
$region0: #{forward.1}
  #allocation0 [shape = 'u32[]', space=smem, size = 0x4, offset = 0x4, fixed_abs, tag = 'smem constant byte address 0x4 - core index']
  #allocation1 [shape = 'u32[72,128]{1,0:T(1,128)}', space=vmem, size = 0x9000, scoped, tag = 'internal scratch']
  %s0 = inlined_call_operand.vmem [shape: s32[32,1], index: 0, kind: input, shape index: {}]
  %s1 = inlined_call_operand.hbm [shape: bf16[100,48], index: 1, kind: input, shape index: {}]
  %s2 = inlined_call_operand.hbm [shape: bf16[496,32], index: 2, kind: input, shape index: {}]
  %s3 = inlined_call_operand.vmem [shape: f32[8,32], index: 3, kind: input, shape index: {}]
  %s4 = inlined_call_operand.hbm [shape: f32[32,32], index: 4, kind: output, shape index: {}]
  %s5 = sld [smem:[#allocation0]]
  $region34: #{forward.1} parent=0
    _
  %s7 = ssub.s32 1, %s5
  %s8 = scalar_select 0, %s7, %s5
  $region1: #{forward.1} parent=0
    #allocation2 [shape = 'u8[26624]{0}', space=vmem, size = 0x6800, scoped, tag = 'input window, operand 1, single buffered']
    #allocation3 [shape = 's32[1]{0}', space=sflag, size = 0x4, scoped, tag = 'scoped memory for forward.1']
    #allocation4 [shape = 's32[1]{0}', space=sflag, size = 0x4, scoped, tag = 'scoped memory for forward.1']
    #allocation5 [shape = 'u8[126976]{0}', space=vmem, size = 0x1f000, scoped, tag = 'input window, operand 2, single buffered']
    #allocation6 [shape = 's32[1]{0}', space=sflag, size = 0x4, scoped, tag = 'scoped memory for forward.1']
    #allocation7 [shape = 'u8[16384]{0}', space=vmem, size = 0x4000, scoped, tag = 'output window, operand 0, single buffered']
    %9 = vsyncpa [#allocation3], 0
    %10 = vsyncpa [#allocation6], 0
    %11 = vsyncpa [#allocation4], 0
    // Predicated region
    $region2: #{forward.1} parent=1 // pred_check
      _
    $region3: #{forward.1} parent=1 // pred_check_branch
      %13 = sbr.rel (0) target = $region5
    $region4: #{forward.1} parent=1 // pred_region
      _
    $region5: #{forward.1} parent=1 // pred_fallthru
      _
    // Predicated region
    $region6: #{forward.1} parent=1 // pred_check
      _
    $region7: #{forward.1} parent=1 // pred_check_branch
      %15 = sbr.rel (0) target = $region9
    $region8: #{forward.1} parent=1 // pred_region
      %17 = vsyncadd [#allocation3], 0
      %s18 = sshll.u32 %s1, 4
      %s19 = int_to_ptr.hbm [resolvable:$true] %s18
      %s20 = sshll.u32 [#allocation2], 4
      %s21 = int_to_ptr.vmem [resolvable:$true] %s20
      %26 = dma.hbm_to_vmem [thread:$0]  %s19, 832, %s21, [#allocation3], 64, 64, 4
    $region9: #{forward.1} parent=1 // pred_fallthru
      _
    // Predicated region
    $region10: #{forward.1} parent=1 // pred_check
      _
    $region11: #{forward.1} parent=1 // pred_check_branch
      %28 = sbr.rel (0) target = $region13
    $region12: #{forward.1} parent=1 // pred_region
      %30 = vsyncadd [#allocation6], 0
      %s31 = sshll.u32 %s2, 4
      %s32 = int_to_ptr.hbm [resolvable:$true] %s31
      %s33 = sshll.u32 [#allocation5], 4
      %s34 = int_to_ptr.vmem [resolvable:$true] %s33
      %39 = dma.hbm_to_vmem [thread:$0]  %s32, 3968, %s34, [#allocation6], 64, 64, 4
    $region13: #{forward.1} parent=1 // pred_fallthru
      _
    // Predicated region
    $region14: #{forward.1} parent=1 // pred_check
      _
    $region15: #{forward.1} parent=1 // pred_check_branch
      %41 = sbr.rel (0) target = $region17
    $region16: #{forward.1} parent=1 // pred_region
      _
    $region17: #{forward.1} parent=1 // pred_fallthru
      _
    // Predicated region
    $region18: #{forward.1} parent=1 // pred_check
      _
    $region19: #{forward.1} parent=1 // pred_check_branch
      %43 = sbr.rel (0) target = $region21
    $region20: #{forward.1} parent=1 // pred_region
      %45 = dma.done [#allocation3], 832
    $region21: #{forward.1} parent=1 // pred_fallthru
      _
    // Predicated region
    $region22: #{forward.1} parent=1 // pred_check
      _
    $region23: #{forward.1} parent=1 // pred_check_branch
      %47 = sbr.rel (0) target = $region25
    $region24: #{forward.1} parent=1 // pred_region
      %49 = dma.done [#allocation6], 3968
    $region25: #{forward.1} parent=1 // pred_fallthru
      _
    %v51 = vld [vmem:[%s0] sm:$0xff]
    %v52 = vld [vmem:[%s0 + $0x8] sm:$0xff]
    %v53 = vld [vmem:[%s0 + $0x10] sm:$0xff]
    %v54 = vld [vmem:[%s0 + $0x18] sm:$0xff]
    %v55 = vlaneseq
    %v56 = vand.u32 %v55, 127
    %57 = vset.pattern.permute.xlu0 0
    %58 = vperm.xlu0 %57, %v51
    %v59 = vpop.permute.xlu0 %58
    %60 = vset.pattern.permute.xlu0 0
    %61 = vperm.xlu0 %60, %v52
    %v62 = vpop.permute.xlu0 %61
    %63 = vset.pattern.permute.xlu0 0
    %64 = vperm.xlu0 %63, %v53
    %v65 = vpop.permute.xlu0 %64
    %66 = vset.pattern.permute.xlu0 0
    %67 = vperm.xlu0 %66, %v54
    %v68 = vpop.permute.xlu0 %67
    %vm69 = vcmp.eq.s32.totalorder %v56, %v59
    %vm70 = vcmp.eq.s32.totalorder %v56, %v62
    %vm71 = vcmp.eq.s32.totalorder %v56, %v65
    %vm72 = vcmp.eq.s32.totalorder %v56, %v68
    %v73 = vsel %vm69, 1, 0
    %v74 = vsel %vm70, 1, 0
    %v75 = vsel %vm71, 1, 0
    %v76 = vsel %vm72, 1, 0
    %v77 = vcvt.s32.f32 %v73
    %v78 = vcvt.s32.f32 %v74
    %v79 = vcvt.s32.f32 %v75
    %v80 = vcvt.s32.f32 %v76
    %v81 = vpack.c.bf16 %v78, %v77
    %v82 = vpack.c.bf16 %v80, %v79
    %v83 = vld [vmem:[#allocation2] sm:$0xf]
    %v84 = vld [vmem:[#allocation2 + $0x4] sm:$0xf]
    %v85 = vld [vmem:[#allocation2 + $0x8] sm:$0xf]
    %v86 = vld [vmem:[#allocation2 + $0xc] sm:$0xf]
    %v87 = vld [vmem:[#allocation2 + $0x10] sm:$0xf]
    %v88 = vld [vmem:[#allocation2 + $0x14] sm:$0xf]
    %v89 = vld [vmem:[#allocation2 + $0x18] sm:$0xf]
    %v90 = vld [vmem:[#allocation2 + $0x1c] sm:$0xf]
    %v91 = vld [vmem:[#allocation2 + $0x20] sm:$0xf]
    %v92 = vld [vmem:[#allocation2 + $0x24] sm:$0xf]
    %v93 = vld [vmem:[#allocation2 + $0x28] sm:$0xf]
    %v94 = vld [vmem:[#allocation2 + $0x2c] sm:$0xf]
    %v95 = vld [vmem:[#allocation2 + $0x30] sm:$0x3]
    %v109 = vunpack.c.l.b16 %v83
    %v110 = vunpack.c.l.b16 %v84
    %v111 = vunpack.c.l.b16 %v85
    %v112 = vunpack.c.l.b16 %v86
    %v113 = vunpack.c.l.b16 %v87
    %v114 = vunpack.c.l.b16 %v88
    %v115 = vunpack.c.l.b16 %v89
    %v116 = vunpack.c.l.b16 %v90
    %v117 = vunpack.c.l.b16 %v91
    %v118 = vunpack.c.l.b16 %v92
    %v119 = vunpack.c.l.b16 %v93
    %v120 = vunpack.c.l.b16 %v94
    %v121 = vunpack.c.l.b16 %v95
    %v122 = vpack.c.b16 %v110, %v109
    %v123 = vpack.c.b16 %v112, %v111
    %v124 = vpack.c.b16 %v114, %v113
    %v125 = vpack.c.b16 %v116, %v115
    %v126 = vpack.c.b16 %v118, %v117
    %v127 = vpack.c.b16 %v120, %v119
    %v128 = vpack.c.b16 %v121, %v121
    %vm135 = vcmask 818176
    %v137 = vsel %vm135, %v81, 0
    %v140 = vsel %vm135, %v82, 0
    %vm142 = vcmask 1041408
    %v144 = vsel %vm142, %v128, 0
    %146 = vmatpush.bf16.msra.mxu0 0
    %147 = vmatpush.bf16.msra.mxu0 %v144
    %148 = vmatpush.bf16.msra.mxu0 %v127
    %149 = vmatpush.bf16.msra.mxu0 %v126
    %150 = vmatpush.bf16.msra.mxu0 %v125
    %151 = vmatpush.bf16.msra.mxu0 %v124
    %152 = vmatpush.bf16.msra.mxu0 %v123
    %153 = vmatpush.bf16.msra.mxu0 %v122
    %154 = vmatmul.bf16.gmra.mxu0 %v137
    %v155 = vpop.f32.mrf.mxu0
    %v156 = vadd.f32 0.0, %v155
    %v157 = vpop.f32.mrf.mxu0
    %v158 = vadd.f32 0.0, %v157
    %159 = vmatmul.bf16.gmra.mxu0 %v140
    %v160 = vpop.f32.mrf.mxu0
    %v161 = vadd.f32 0.0, %v160
    %v162 = vpop.f32.mrf.mxu0
    %v163 = vadd.f32 0.0, %v162
    %164 = vdwg.mxu0
    %v165 = vlaneseq
    %v166 = vshrl.u32 %v165, 7
    %v167 = vadd.s32 %v166, 8
    %v168 = vadd.s32 %v166, 16
    %v169 = vadd.s32 %v166, 24
    %v170 = vand.u32 %v166, 15
    %v171 = vand.u32 %v167, 15
    %v172 = vand.u32 %v168, 15
    %v173 = vand.u32 %v169, 15
    %vm174 = vcmp.ge.s32.totalorder %v170, 1
    %vm175 = vcmp.ge.s32.totalorder %v171, 1
    %vm176 = vcmp.ge.s32.totalorder %v172, 1
    %vm177 = vcmp.ge.s32.totalorder %v173, 1
    %v178 = vrot.slane %v156, 7
    %v179 = vrot.slane %v158, 7
    %v180 = vrot.slane %v161, 7
    %v181 = vrot.slane %v163, 7
    %vm182 = vcmp.lt.s32.totalorder %v166, 1
    %v183 = vsel %vm182, %v180, %v181
    %v184 = vsel %vm182, %v179, %v180
    %v185 = vsel %vm182, %v178, %v179
    %v186 = vsel %vm182, %v181, %v178
    %v187 = vsel %vm174, 1, 0
    %v188 = vsel %vm175, 1, 0
    %v189 = vsel %vm176, 1, 0
    %v190 = vsel %vm177, 1, 0
    %vm191 = vcmp.eq.s32.totalorder %v187, 1
    %vm192 = vcmp.eq.s32.totalorder %v188, 1
    %vm193 = vcmp.eq.s32.totalorder %v189, 1
    %vm194 = vcmp.eq.s32.totalorder %v190, 1
    %v195 = vsel %vm191, %v186, 0.0
    %v196 = vsel %vm192, %v185, 0.0
    %v197 = vsel %vm193, %v184, 0.0
    %v198 = vsel %vm194, %v183, 0.0
    %v199 = vpack.c.bf16 %v196, %v195
    %v200 = vpack.c.bf16 %v198, %v197
    %v201 = vld [vmem:[#allocation5] sm:$0xf]
    %v202 = vld [vmem:[#allocation5 + $0x4] sm:$0xf]
    %v203 = vld [vmem:[#allocation5 + $0x8] sm:$0xf]
    %v204 = vld [vmem:[#allocation5 + $0xc] sm:$0xf]
    %v205 = vld [vmem:[#allocation5 + $0x10] sm:$0xf]
    %v206 = vld [vmem:[#allocation5 + $0x14] sm:$0xf]
    %v207 = vpack.c.bf16 %v158, %v156
    %v208 = vpack.c.bf16 %v163, %v161
    %v209 = vld [vmem:[#allocation5 + $0x18] sm:$0xf]
    %v210 = vld [vmem:[#allocation5 + $0x1c] sm:$0xf]
    %v211 = vld [vmem:[#allocation5 + $0x20] sm:$0xf]
    %v212 = vld [vmem:[#allocation5 + $0x24] sm:$0xf]
    %v213 = vld [vmem:[#allocation5 + $0x28] sm:$0xf]
    %v214 = vld [vmem:[#allocation5 + $0x2c] sm:$0xf]
    %v221 = vunpack.c.l.b16 %v209
    %v222 = vunpack.c.l.b16 %v210
    %v223 = vunpack.c.l.b16 %v211
    %v224 = vunpack.c.l.b16 %v212
    %v225 = vunpack.c.l.b16 %v213
    %v226 = vunpack.c.l.b16 %v214
    %v227 = vpack.c.b16 %v222, %v221
    %v228 = vpack.c.b16 %v224, %v223
    %v229 = vpack.c.b16 %v226, %v225
    %vm233 = vcmask 392192
    %v235 = vsel %vm233, %v207, 0
    %v238 = vsel %vm233, %v208, 0
    %240 = vmatpush.bf16.msra.mxu0 0
    %241 = vmatpush.bf16.msra.mxu0 0
    %242 = vmatpush.bf16.msra.mxu0 0
    %243 = vmatpush.bf16.msra.mxu0 0
    %244 = vmatpush.bf16.msra.mxu0 0
    %245 = vmatpush.bf16.msra.mxu0 %v229
    %246 = vmatpush.bf16.msra.mxu0 %v228
    %247 = vmatpush.bf16.msra.mxu0 %v227
    %248 = vmatmul.bf16.gmra.mxu0 %v235
    %v249 = vpop.f32.mrf.mxu0
    %v250 = vadd.f32 0.0, %v249
    %v251 = vpop.f32.mrf.mxu0
    %v252 = vadd.f32 0.0, %v251
    %253 = vmatmul.bf16.gmra.mxu0 %v238
    %v254 = vpop.f32.mrf.mxu0
    %v255 = vadd.f32 0.0, %v254
    %v256 = vpop.f32.mrf.mxu0
    %v257 = vadd.f32 0.0, %v256
    %258 = vdwg.mxu0
    %v265 = vunpack.c.l.b16 %v201
    %v266 = vunpack.c.l.b16 %v202
    %v267 = vunpack.c.l.b16 %v203
    %v268 = vunpack.c.l.b16 %v204
    %v269 = vunpack.c.l.b16 %v205
    %v270 = vunpack.c.l.b16 %v206
    %v271 = vpack.c.b16 %v266, %v265
    %v272 = vpack.c.b16 %v268, %v267
    %v273 = vpack.c.b16 %v270, %v269
    %v278 = vsel %vm233, %v199, 0
    %v281 = vsel %vm233, %v200, 0
    %283 = vmatpush.bf16.msra.mxu0 0
    %284 = vmatpush.bf16.msra.mxu0 0
    %285 = vmatpush.bf16.msra.mxu0 0
    %286 = vmatpush.bf16.msra.mxu0 0
    %287 = vmatpush.bf16.msra.mxu0 0
    %288 = vmatpush.bf16.msra.mxu0 %v273
    %289 = vmatpush.bf16.msra.mxu0 %v272
    %290 = vmatpush.bf16.msra.mxu0 %v271
    %291 = vmatmul.bf16.gmra.mxu0 %v278
    %v292 = vpop.f32.mrf.mxu0
    %v293 = vadd.f32 %v250, %v292
    %v294 = vpop.f32.mrf.mxu0
    %v295 = vadd.f32 %v252, %v294
    %296 = vmatmul.bf16.gmra.mxu0 %v281
    %v297 = vpop.f32.mrf.mxu0
    %v298 = vadd.f32 %v255, %v297
    %v299 = vpop.f32.mrf.mxu0
    %v300 = vadd.f32 %v257, %v299
    %301 = vdwg.mxu0
    %v302 = vld [vmem:[%s3] sm:$0x1]
    %v303 = vperm.slane %v302, 0
    %v304 = vadd.f32 %v293, %v303
    %v305 = vadd.f32 %v295, %v303
    %v306 = vadd.f32 %v298, %v303
    %v307 = vadd.f32 %v300, %v303
    %v308 = vmax.f32 %v304, 0.0
    %v309 = vmax.f32 %v305, 0.0
    %v310 = vmax.f32 %v306, 0.0
    %v311 = vmax.f32 %v307, 0.0
    %v312 = vrot.slane %v308, 7
    %v313 = vrot.slane %v309, 7
    %v314 = vrot.slane %v310, 7
    %v315 = vrot.slane %v311, 7
    %v316 = vsel %vm182, %v314, %v315
    %v317 = vsel %vm182, %v313, %v314
    %v318 = vsel %vm182, %v312, %v313
    %v319 = vsel %vm182, %v315, %v312
    %v320 = vsel %vm191, %v319, 0.0
    %v321 = vsel %vm192, %v318, 0.0
    %v322 = vsel %vm193, %v317, 0.0
    %v323 = vsel %vm194, %v316, 0.0
    %v324 = vpack.c.bf16 %v321, %v320
    %v325 = vpack.c.bf16 %v323, %v322
    %v326 = vld [vmem:[#allocation5 + $0x30] sm:$0xf]
    %v327 = vld [vmem:[#allocation5 + $0x34] sm:$0xf]
    %v328 = vld [vmem:[#allocation5 + $0x38] sm:$0xf]
    %v329 = vld [vmem:[#allocation5 + $0x3c] sm:$0xf]
    %v330 = vpack.c.bf16 %v309, %v308
    %v331 = vpack.c.bf16 %v311, %v310
    %v332 = vld [vmem:[#allocation5 + $0x40] sm:$0xf]
    %v333 = vld [vmem:[#allocation5 + $0x44] sm:$0xf]
    %v334 = vld [vmem:[#allocation5 + $0x48] sm:$0xf]
    %v335 = vld [vmem:[#allocation5 + $0x4c] sm:$0xf]
    %v340 = vunpack.c.l.b16 %v332
    %v341 = vunpack.c.l.b16 %v333
    %v342 = vunpack.c.l.b16 %v334
    %v343 = vunpack.c.l.b16 %v335
    %v344 = vpack.c.b16 %v341, %v340
    %v345 = vpack.c.b16 %v343, %v342
    %vm348 = vcmask 261120
    %v350 = vsel %vm348, %v330, 0
    %v353 = vsel %vm348, %v331, 0
    %355 = vmatpush.bf16.msra.mxu0 0
    %356 = vmatpush.bf16.msra.mxu0 0
    %357 = vmatpush.bf16.msra.mxu0 0
    %358 = vmatpush.bf16.msra.mxu0 0
    %359 = vmatpush.bf16.msra.mxu0 0
    %360 = vmatpush.bf16.msra.mxu0 0
    %361 = vmatpush.bf16.msra.mxu0 %v345
    %362 = vmatpush.bf16.msra.mxu0 %v344
    %363 = vmatmul.bf16.gmra.mxu0 %v350
    %v364 = vpop.f32.mrf.mxu0
    %v365 = vadd.f32 0.0, %v364
    %v366 = vpop.f32.mrf.mxu0
    %v367 = vadd.f32 0.0, %v366
    %368 = vmatmul.bf16.gmra.mxu0 %v353
    %v369 = vpop.f32.mrf.mxu0
    %v370 = vadd.f32 0.0, %v369
    %v371 = vpop.f32.mrf.mxu0
    %v372 = vadd.f32 0.0, %v371
    %373 = vdwg.mxu0
    %v378 = vunpack.c.l.b16 %v326
    %v379 = vunpack.c.l.b16 %v327
    %v380 = vunpack.c.l.b16 %v328
    %v381 = vunpack.c.l.b16 %v329
    %v382 = vpack.c.b16 %v379, %v378
    %v383 = vpack.c.b16 %v381, %v380
    %v387 = vsel %vm348, %v324, 0
    %v390 = vsel %vm348, %v325, 0
    %392 = vmatpush.bf16.msra.mxu0 0
    %393 = vmatpush.bf16.msra.mxu0 0
    %394 = vmatpush.bf16.msra.mxu0 0
    %395 = vmatpush.bf16.msra.mxu0 0
    %396 = vmatpush.bf16.msra.mxu0 0
    %397 = vmatpush.bf16.msra.mxu0 0
    %398 = vmatpush.bf16.msra.mxu0 %v383
    %399 = vmatpush.bf16.msra.mxu0 %v382
    %400 = vmatmul.bf16.gmra.mxu0 %v387
    %v401 = vpop.f32.mrf.mxu0
    %v402 = vadd.f32 %v365, %v401
    %v403 = vpop.f32.mrf.mxu0
    %v404 = vadd.f32 %v367, %v403
    %405 = vmatmul.bf16.gmra.mxu0 %v390
    %v406 = vpop.f32.mrf.mxu0
    %v407 = vadd.f32 %v370, %v406
    %v408 = vpop.f32.mrf.mxu0
    %v409 = vadd.f32 %v372, %v408
    %410 = vdwg.mxu0
    %v411 = vld [vmem:[%s3 + $0x1] sm:$0x1]
    %v412 = vperm.slane %v411, 0
    %v413 = vadd.f32 %v402, %v412
    %v414 = vadd.f32 %v404, %v412
    %v415 = vadd.f32 %v407, %v412
    %v416 = vadd.f32 %v409, %v412
    %v417 = vmax.f32 %v413, 0.0
    %v418 = vmax.f32 %v414, 0.0
    %v419 = vmax.f32 %v415, 0.0
    %v420 = vmax.f32 %v416, 0.0
    %v421 = vld [vmem:[#allocation5 + $0x50] sm:$0xf]
    %v422 = vld [vmem:[#allocation5 + $0x54] sm:$0xf]
    %v423 = vld [vmem:[#allocation5 + $0x58] sm:$0xf]
    %v424 = vld [vmem:[#allocation5 + $0x5c] sm:$0xf]
    %v425 = vld [vmem:[#allocation5 + $0x60] sm:$0xf]
    %v426 = vld [vmem:[#allocation5 + $0x64] sm:$0xf]
    %v427 = vld [vmem:[%s3 + $0x2] sm:$0x1]
    %v428 = vperm.slane %v427, 0
    %v435 = vunpack.c.l.b16 %v421
    %v436 = vunpack.c.l.b16 %v422
    %v437 = vunpack.c.l.b16 %v423
    %v438 = vunpack.c.l.b16 %v424
    %v439 = vunpack.c.l.b16 %v425
    %v440 = vunpack.c.l.b16 %v426
    %v441 = vpack.c.b16 %v436, %v435
    %v442 = vpack.c.b16 %v438, %v437
    %v443 = vpack.c.b16 %v440, %v439
    %447 = vmatpush.bf16.msra.mxu0 0
    %448 = vmatpush.bf16.msra.mxu0 0
    %449 = vmatpush.bf16.msra.mxu0 0
    %450 = vmatpush.bf16.msra.mxu0 0
    %451 = vmatpush.bf16.msra.mxu0 0
    %452 = vmatpush.bf16.msra.mxu0 %v443
    %453 = vmatpush.bf16.msra.mxu0 %v442
    %454 = vmatpush.bf16.msra.mxu0 %v441
    %455 = vmatmul.bf16.gmra.mxu0 %v235
    %v456 = vpop.f32.mrf.mxu0
    %v457 = vadd.f32 %v428, %v456
    %v458 = vpop.f32.mrf.mxu0
    %v459 = vadd.f32 %v428, %v458
    %460 = vmatmul.bf16.gmra.mxu0 %v238
    %v461 = vpop.f32.mrf.mxu0
    %v462 = vadd.f32 %v428, %v461
    %v463 = vpop.f32.mrf.mxu0
    %v464 = vadd.f32 %v428, %v463
    %465 = vdwg.mxu0
    %v466 = vadd.f32 %v417, %v457
    %v467 = vadd.f32 %v418, %v459
    %v468 = vadd.f32 %v419, %v462
    %v469 = vadd.f32 %v420, %v464
    %v470 = vmax.f32 %v466, 0.0
    %v471 = vmax.f32 %v467, 0.0
    %v472 = vmax.f32 %v468, 0.0
    %v473 = vmax.f32 %v469, 0.0
    %vm474 = vcmp.ge.s32.totalorder %v170, 2
    %vm475 = vcmp.ge.s32.totalorder %v171, 2
    %vm476 = vcmp.ge.s32.totalorder %v172, 2
    %vm477 = vcmp.ge.s32.totalorder %v173, 2
    %v478 = vrot.slane %v470, 6
    %v479 = vrot.slane %v471, 6
    %v480 = vrot.slane %v472, 6
    %v481 = vrot.slane %v473, 6
    %vm482 = vcmp.lt.s32.totalorder %v166, 2
    %v483 = vsel %vm482, %v480, %v481
    %v484 = vsel %vm482, %v479, %v480
    %v485 = vsel %vm482, %v478, %v479
    %v486 = vsel %vm482, %v481, %v478
    %v487 = vsel %vm474, 1, 0
    %v488 = vsel %vm475, 1, 0
    %v489 = vsel %vm476, 1, 0
    %v490 = vsel %vm477, 1, 0
    %vm491 = vcmp.eq.s32.totalorder %v487, 1
    %vm492 = vcmp.eq.s32.totalorder %v488, 1
    %vm493 = vcmp.eq.s32.totalorder %v489, 1
    %vm494 = vcmp.eq.s32.totalorder %v490, 1
    %v495 = vsel %vm491, %v486, 0.0
    %v496 = vsel %vm492, %v485, 0.0
    %v497 = vsel %vm493, %v484, 0.0
    %v498 = vsel %vm494, %v483, 0.0
    %v499 = vpack.c.bf16 %v496, %v495
    %v500 = vpack.c.bf16 %v498, %v497
    %v501 = vld [vmem:[#allocation5 + $0x68] sm:$0xf]
    %v502 = vld [vmem:[#allocation5 + $0x6c] sm:$0xf]
    %v503 = vld [vmem:[#allocation5 + $0x70] sm:$0xf]
    %v504 = vld [vmem:[#allocation5 + $0x74] sm:$0xf]
    %v505 = vpack.c.bf16 %v471, %v470
    %v506 = vpack.c.bf16 %v473, %v472
    %v507 = vld [vmem:[#allocation5 + $0x78] sm:$0xf]
    %v508 = vld [vmem:[#allocation5 + $0x7c] sm:$0xf]
    %v509 = vld [vmem:[#allocation5 + $0x80] sm:$0xf]
    %v510 = vld [vmem:[#allocation5 + $0x84] sm:$0xf]
    %v515 = vunpack.c.l.b16 %v507
    %v516 = vunpack.c.l.b16 %v508
    %v517 = vunpack.c.l.b16 %v509
    %v518 = vunpack.c.l.b16 %v510
    %v519 = vpack.c.b16 %v516, %v515
    %v520 = vpack.c.b16 %v518, %v517
    %v524 = vsel %vm348, %v505, 0
    %v527 = vsel %vm348, %v506, 0
    %529 = vmatpush.bf16.msra.mxu0 0
    %530 = vmatpush.bf16.msra.mxu0 0
    %531 = vmatpush.bf16.msra.mxu0 0
    %532 = vmatpush.bf16.msra.mxu0 0
    %533 = vmatpush.bf16.msra.mxu0 0
    %534 = vmatpush.bf16.msra.mxu0 0
    %535 = vmatpush.bf16.msra.mxu0 %v520
    %536 = vmatpush.bf16.msra.mxu0 %v519
    %537 = vmatmul.bf16.gmra.mxu0 %v524
    %v538 = vpop.f32.mrf.mxu0
    %v539 = vadd.f32 0.0, %v538
    %v540 = vpop.f32.mrf.mxu0
    %v541 = vadd.f32 0.0, %v540
    %542 = vmatmul.bf16.gmra.mxu0 %v527
    %v543 = vpop.f32.mrf.mxu0
    %v544 = vadd.f32 0.0, %v543
    %v545 = vpop.f32.mrf.mxu0
    %v546 = vadd.f32 0.0, %v545
    %547 = vdwg.mxu0
    %v552 = vunpack.c.l.b16 %v501
    %v553 = vunpack.c.l.b16 %v502
    %v554 = vunpack.c.l.b16 %v503
    %v555 = vunpack.c.l.b16 %v504
    %v556 = vpack.c.b16 %v553, %v552
    %v557 = vpack.c.b16 %v555, %v554
    %v561 = vsel %vm348, %v499, 0
    %v564 = vsel %vm348, %v500, 0
    %566 = vmatpush.bf16.msra.mxu0 0
    %567 = vmatpush.bf16.msra.mxu0 0
    %568 = vmatpush.bf16.msra.mxu0 0
    %569 = vmatpush.bf16.msra.mxu0 0
    %570 = vmatpush.bf16.msra.mxu0 0
    %571 = vmatpush.bf16.msra.mxu0 0
    %572 = vmatpush.bf16.msra.mxu0 %v557
    %573 = vmatpush.bf16.msra.mxu0 %v556
    %574 = vmatmul.bf16.gmra.mxu0 %v561
    %v575 = vpop.f32.mrf.mxu0
    %v576 = vadd.f32 %v539, %v575
    %v577 = vpop.f32.mrf.mxu0
    %v578 = vadd.f32 %v541, %v577
    %579 = vmatmul.bf16.gmra.mxu0 %v564
    %v580 = vpop.f32.mrf.mxu0
    %v581 = vadd.f32 %v544, %v580
    %v582 = vpop.f32.mrf.mxu0
    %v583 = vadd.f32 %v546, %v582
    %584 = vdwg.mxu0
    %v585 = vld [vmem:[%s3 + $0x3] sm:$0x1]
    %v586 = vperm.slane %v585, 0
    %v587 = vadd.f32 %v576, %v586
    %v588 = vadd.f32 %v578, %v586
    %v589 = vadd.f32 %v581, %v586
    %v590 = vadd.f32 %v583, %v586
    %v591 = vmax.f32 %v587, 0.0
    %v592 = vmax.f32 %v588, 0.0
    %v593 = vmax.f32 %v589, 0.0
    %v594 = vmax.f32 %v590, 0.0
    %v595 = vrot.slane %v591, 6
    %v596 = vrot.slane %v592, 6
    %v597 = vrot.slane %v593, 6
    %v598 = vrot.slane %v594, 6
    %v599 = vsel %vm482, %v597, %v598
    %v600 = vsel %vm482, %v596, %v597
    %v601 = vsel %vm482, %v595, %v596
    %v602 = vsel %vm482, %v598, %v595
    %v603 = vsel %vm491, %v602, 0.0
    %v604 = vsel %vm492, %v601, 0.0
    %v605 = vsel %vm493, %v600, 0.0
    %v606 = vsel %vm494, %v599, 0.0
    %v607 = vpack.c.bf16 %v604, %v603
    %v608 = vpack.c.bf16 %v606, %v605
    %v609 = vld [vmem:[#allocation5 + $0x88] sm:$0xf]
    %v610 = vld [vmem:[#allocation5 + $0x8c] sm:$0xf]
    %v611 = vld [vmem:[#allocation5 + $0x90] sm:$0xf]
    %v612 = vld [vmem:[#allocation5 + $0x94] sm:$0xf]
    %v613 = vpack.c.bf16 %v592, %v591
    %v614 = vpack.c.bf16 %v594, %v593
    %v615 = vld [vmem:[#allocation5 + $0x98] sm:$0xf]
    %v616 = vld [vmem:[#allocation5 + $0x9c] sm:$0xf]
    %v617 = vld [vmem:[#allocation5 + $0xa0] sm:$0xf]
    %v618 = vld [vmem:[#allocation5 + $0xa4] sm:$0xf]
    %v623 = vunpack.c.l.b16 %v615
    %v624 = vunpack.c.l.b16 %v616
    %v625 = vunpack.c.l.b16 %v617
    %v626 = vunpack.c.l.b16 %v618
    %v627 = vpack.c.b16 %v624, %v623
    %v628 = vpack.c.b16 %v626, %v625
    %v632 = vsel %vm348, %v613, 0
    %v635 = vsel %vm348, %v614, 0
    %637 = vmatpush.bf16.msra.mxu0 0
    %638 = vmatpush.bf16.msra.mxu0 0
    %639 = vmatpush.bf16.msra.mxu0 0
    %640 = vmatpush.bf16.msra.mxu0 0
    %641 = vmatpush.bf16.msra.mxu0 0
    %642 = vmatpush.bf16.msra.mxu0 0
    %643 = vmatpush.bf16.msra.mxu0 %v628
    %644 = vmatpush.bf16.msra.mxu0 %v627
    %645 = vmatmul.bf16.gmra.mxu0 %v632
    %v646 = vpop.f32.mrf.mxu0
    %v647 = vadd.f32 0.0, %v646
    %v648 = vpop.f32.mrf.mxu0
    %v649 = vadd.f32 0.0, %v648
    %650 = vmatmul.bf16.gmra.mxu0 %v635
    %v651 = vpop.f32.mrf.mxu0
    %v652 = vadd.f32 0.0, %v651
    %v653 = vpop.f32.mrf.mxu0
    %v654 = vadd.f32 0.0, %v653
    %655 = vdwg.mxu0
    %v660 = vunpack.c.l.b16 %v609
    %v661 = vunpack.c.l.b16 %v610
    %v662 = vunpack.c.l.b16 %v611
    %v663 = vunpack.c.l.b16 %v612
    %v664 = vpack.c.b16 %v661, %v660
    %v665 = vpack.c.b16 %v663, %v662
    %v669 = vsel %vm348, %v607, 0
    %v672 = vsel %vm348, %v608, 0
    %674 = vmatpush.bf16.msra.mxu0 0
    %675 = vmatpush.bf16.msra.mxu0 0
    %676 = vmatpush.bf16.msra.mxu0 0
    %677 = vmatpush.bf16.msra.mxu0 0
    %678 = vmatpush.bf16.msra.mxu0 0
    %679 = vmatpush.bf16.msra.mxu0 0
    %680 = vmatpush.bf16.msra.mxu0 %v665
    %681 = vmatpush.bf16.msra.mxu0 %v664
    %682 = vmatmul.bf16.gmra.mxu0 %v669
    %v683 = vpop.f32.mrf.mxu0
    %v684 = vadd.f32 %v647, %v683
    %v685 = vpop.f32.mrf.mxu0
    %v686 = vadd.f32 %v649, %v685
    %687 = vmatmul.bf16.gmra.mxu0 %v672
    %v688 = vpop.f32.mrf.mxu0
    %v689 = vadd.f32 %v652, %v688
    %v690 = vpop.f32.mrf.mxu0
    %v691 = vadd.f32 %v654, %v690
    %692 = vdwg.mxu0
    %v693 = vld [vmem:[%s3 + $0x4] sm:$0x1]
    %v694 = vperm.slane %v693, 0
    %v695 = vadd.f32 %v684, %v694
    %v696 = vadd.f32 %v686, %v694
    %v697 = vadd.f32 %v689, %v694
    %v698 = vadd.f32 %v691, %v694
    %v699 = vmax.f32 %v695, 0.0
    %v700 = vmax.f32 %v696, 0.0
    %v701 = vmax.f32 %v697, 0.0
    %v702 = vmax.f32 %v698, 0.0
    %v703 = vadd.f32 %v699, %v470
    %v704 = vadd.f32 %v700, %v471
    %v705 = vadd.f32 %v701, %v472
    %v706 = vadd.f32 %v702, %v473
    %v707 = vmax.f32 %v703, 0.0
    %v708 = vmax.f32 %v704, 0.0
    %v709 = vmax.f32 %v705, 0.0
    %v710 = vmax.f32 %v706, 0.0
    %vm711 = vcmp.ge.s32.totalorder %v170, 4
    %vm712 = vcmp.ge.s32.totalorder %v171, 4
    %vm713 = vcmp.ge.s32.totalorder %v172, 4
    %vm714 = vcmp.ge.s32.totalorder %v173, 4
    %v715 = vrot.slane %v707, 4
    %v716 = vrot.slane %v708, 4
    %v717 = vrot.slane %v709, 4
    %v718 = vrot.slane %v710, 4
    %vm719 = vcmp.lt.s32.totalorder %v166, 4
    %v720 = vsel %vm719, %v717, %v718
    %v721 = vsel %vm719, %v716, %v717
    %v722 = vsel %vm719, %v715, %v716
    %v723 = vsel %vm719, %v718, %v715
    %v724 = vsel %vm711, 1, 0
    %v725 = vsel %vm712, 1, 0
    %v726 = vsel %vm713, 1, 0
    %v727 = vsel %vm714, 1, 0
    %vm728 = vcmp.eq.s32.totalorder %v724, 1
    %vm729 = vcmp.eq.s32.totalorder %v725, 1
    %vm730 = vcmp.eq.s32.totalorder %v726, 1
    %vm731 = vcmp.eq.s32.totalorder %v727, 1
    %v732 = vsel %vm728, %v723, 0.0
    %v733 = vsel %vm729, %v722, 0.0
    %v734 = vsel %vm730, %v721, 0.0
    %v735 = vsel %vm731, %v720, 0.0
    %v736 = vpack.c.bf16 %v733, %v732
    %v737 = vpack.c.bf16 %v735, %v734
    %v738 = vld [vmem:[#allocation5 + $0xa8] sm:$0xf]
    %v739 = vld [vmem:[#allocation5 + $0xac] sm:$0xf]
    %v740 = vld [vmem:[#allocation5 + $0xb0] sm:$0xf]
    %v741 = vld [vmem:[#allocation5 + $0xb4] sm:$0xf]
    %v742 = vpack.c.bf16 %v708, %v707
    %v743 = vpack.c.bf16 %v710, %v709
    %v744 = vld [vmem:[#allocation5 + $0xb8] sm:$0xf]
    %v745 = vld [vmem:[#allocation5 + $0xbc] sm:$0xf]
    %v746 = vld [vmem:[#allocation5 + $0xc0] sm:$0xf]
    %v747 = vld [vmem:[#allocation5 + $0xc4] sm:$0xf]
    %v752 = vunpack.c.l.b16 %v744
    %v753 = vunpack.c.l.b16 %v745
    %v754 = vunpack.c.l.b16 %v746
    %v755 = vunpack.c.l.b16 %v747
    %v756 = vpack.c.b16 %v753, %v752
    %v757 = vpack.c.b16 %v755, %v754
    %v761 = vsel %vm348, %v742, 0
    %v764 = vsel %vm348, %v743, 0
    %766 = vmatpush.bf16.msra.mxu0 0
    %767 = vmatpush.bf16.msra.mxu0 0
    %768 = vmatpush.bf16.msra.mxu0 0
    %769 = vmatpush.bf16.msra.mxu0 0
    %770 = vmatpush.bf16.msra.mxu0 0
    %771 = vmatpush.bf16.msra.mxu0 0
    %772 = vmatpush.bf16.msra.mxu0 %v757
    %773 = vmatpush.bf16.msra.mxu0 %v756
    %774 = vmatmul.bf16.gmra.mxu0 %v761
    %v775 = vpop.f32.mrf.mxu0
    %v776 = vadd.f32 0.0, %v775
    %v777 = vpop.f32.mrf.mxu0
    %v778 = vadd.f32 0.0, %v777
    %779 = vmatmul.bf16.gmra.mxu0 %v764
    %v780 = vpop.f32.mrf.mxu0
    %v781 = vadd.f32 0.0, %v780
    %v782 = vpop.f32.mrf.mxu0
    %v783 = vadd.f32 0.0, %v782
    %784 = vdwg.mxu0
    %v789 = vunpack.c.l.b16 %v738
    %v790 = vunpack.c.l.b16 %v739
    %v791 = vunpack.c.l.b16 %v740
    %v792 = vunpack.c.l.b16 %v741
    %v793 = vpack.c.b16 %v790, %v789
    %v794 = vpack.c.b16 %v792, %v791
    %v798 = vsel %vm348, %v736, 0
    %v801 = vsel %vm348, %v737, 0
    %803 = vmatpush.bf16.msra.mxu0 0
    %804 = vmatpush.bf16.msra.mxu0 0
    %805 = vmatpush.bf16.msra.mxu0 0
    %806 = vmatpush.bf16.msra.mxu0 0
    %807 = vmatpush.bf16.msra.mxu0 0
    %808 = vmatpush.bf16.msra.mxu0 0
    %809 = vmatpush.bf16.msra.mxu0 %v794
    %810 = vmatpush.bf16.msra.mxu0 %v793
    %811 = vmatmul.bf16.gmra.mxu0 %v798
    %v812 = vpop.f32.mrf.mxu0
    %v813 = vadd.f32 %v776, %v812
    %v814 = vpop.f32.mrf.mxu0
    %v815 = vadd.f32 %v778, %v814
    %816 = vmatmul.bf16.gmra.mxu0 %v801
    %v817 = vpop.f32.mrf.mxu0
    %v818 = vadd.f32 %v781, %v817
    %v819 = vpop.f32.mrf.mxu0
    %v820 = vadd.f32 %v783, %v819
    %821 = vdwg.mxu0
    %v822 = vld [vmem:[%s3 + $0x5] sm:$0x1]
    %v823 = vperm.slane %v822, 0
    %v824 = vadd.f32 %v813, %v823
    %v825 = vadd.f32 %v815, %v823
    %v826 = vadd.f32 %v818, %v823
    %v827 = vadd.f32 %v820, %v823
    %v828 = vmax.f32 %v824, 0.0
    %v829 = vmax.f32 %v825, 0.0
    %v830 = vmax.f32 %v826, 0.0
    %v831 = vmax.f32 %v827, 0.0
    %v832 = vrot.slane %v828, 4
    %v833 = vrot.slane %v829, 4
    %v834 = vrot.slane %v830, 4
    %v835 = vrot.slane %v831, 4
    %v836 = vsel %vm719, %v834, %v835
    %v837 = vsel %vm719, %v833, %v834
    %v838 = vsel %vm719, %v832, %v833
    %v839 = vsel %vm719, %v835, %v832
    %v840 = vsel %vm728, %v839, 0.0
    %v841 = vsel %vm729, %v838, 0.0
    %v842 = vsel %vm730, %v837, 0.0
    %v843 = vsel %vm731, %v836, 0.0
    %v844 = vpack.c.bf16 %v841, %v840
    %v845 = vpack.c.bf16 %v843, %v842
    %v846 = vld [vmem:[#allocation5 + $0xc8] sm:$0xf]
    %v847 = vld [vmem:[#allocation5 + $0xcc] sm:$0xf]
    %v848 = vld [vmem:[#allocation5 + $0xd0] sm:$0xf]
    %v849 = vld [vmem:[#allocation5 + $0xd4] sm:$0xf]
    %v850 = vpack.c.bf16 %v829, %v828
    %v851 = vpack.c.bf16 %v831, %v830
    %v852 = vld [vmem:[#allocation5 + $0xd8] sm:$0xf]
    %v853 = vld [vmem:[#allocation5 + $0xdc] sm:$0xf]
    %v854 = vld [vmem:[#allocation5 + $0xe0] sm:$0xf]
    %v855 = vld [vmem:[#allocation5 + $0xe4] sm:$0xf]
    %v860 = vunpack.c.l.b16 %v852
    %v861 = vunpack.c.l.b16 %v853
    %v862 = vunpack.c.l.b16 %v854
    %v863 = vunpack.c.l.b16 %v855
    %v864 = vpack.c.b16 %v861, %v860
    %v865 = vpack.c.b16 %v863, %v862
    %v869 = vsel %vm348, %v850, 0
    %v872 = vsel %vm348, %v851, 0
    %874 = vmatpush.bf16.msra.mxu0 0
    %875 = vmatpush.bf16.msra.mxu0 0
    %876 = vmatpush.bf16.msra.mxu0 0
    %877 = vmatpush.bf16.msra.mxu0 0
    %878 = vmatpush.bf16.msra.mxu0 0
    %879 = vmatpush.bf16.msra.mxu0 0
    %880 = vmatpush.bf16.msra.mxu0 %v865
    %881 = vmatpush.bf16.msra.mxu0 %v864
    %882 = vmatmul.bf16.gmra.mxu0 %v869
    %v883 = vpop.f32.mrf.mxu0
    %v884 = vadd.f32 0.0, %v883
    %v885 = vpop.f32.mrf.mxu0
    %v886 = vadd.f32 0.0, %v885
    %887 = vmatmul.bf16.gmra.mxu0 %v872
    %v888 = vpop.f32.mrf.mxu0
    %v889 = vadd.f32 0.0, %v888
    %v890 = vpop.f32.mrf.mxu0
    %v891 = vadd.f32 0.0, %v890
    %892 = vdwg.mxu0
    %v897 = vunpack.c.l.b16 %v846
    %v898 = vunpack.c.l.b16 %v847
    %v899 = vunpack.c.l.b16 %v848
    %v900 = vunpack.c.l.b16 %v849
    %v901 = vpack.c.b16 %v898, %v897
    %v902 = vpack.c.b16 %v900, %v899
    %v906 = vsel %vm348, %v844, 0
    %v909 = vsel %vm348, %v845, 0
    %911 = vmatpush.bf16.msra.mxu0 0
    %912 = vmatpush.bf16.msra.mxu0 0
    %913 = vmatpush.bf16.msra.mxu0 0
    %914 = vmatpush.bf16.msra.mxu0 0
    %915 = vmatpush.bf16.msra.mxu0 0
    %916 = vmatpush.bf16.msra.mxu0 0
    %917 = vmatpush.bf16.msra.mxu0 %v902
    %918 = vmatpush.bf16.msra.mxu0 %v901
    %919 = vmatmul.bf16.gmra.mxu0 %v906
    %v920 = vpop.f32.mrf.mxu0
    %v921 = vadd.f32 %v884, %v920
    %v922 = vpop.f32.mrf.mxu0
    %v923 = vadd.f32 %v886, %v922
    %924 = vmatmul.bf16.gmra.mxu0 %v909
    %v925 = vpop.f32.mrf.mxu0
    %v926 = vadd.f32 %v889, %v925
    %v927 = vpop.f32.mrf.mxu0
    %v928 = vadd.f32 %v891, %v927
    %929 = vdwg.mxu0
    %v930 = vld [vmem:[%s3 + $0x6] sm:$0x1]
    %v931 = vperm.slane %v930, 0
    %v932 = vadd.f32 %v921, %v931
    %v933 = vadd.f32 %v923, %v931
    %v934 = vadd.f32 %v926, %v931
    %v935 = vadd.f32 %v928, %v931
    %v936 = vmax.f32 %v932, 0.0
    %v937 = vmax.f32 %v933, 0.0
    %v938 = vmax.f32 %v934, 0.0
    %v939 = vmax.f32 %v935, 0.0
    %v940 = vadd.f32 %v936, %v707
    %v941 = vadd.f32 %v937, %v708
    %v942 = vadd.f32 %v938, %v709
    %v943 = vadd.f32 %v939, %v710
    %v944 = vmax.f32 %v940, 0.0
    %v945 = vmax.f32 %v941, 0.0
    %v946 = vmax.f32 %v942, 0.0
    %v947 = vmax.f32 %v943, 0.0
    %v948 = vpack.c.bf16 %v945, %v944
    %v949 = vpack.c.bf16 %v947, %v946
    %v950 = vld [vmem:[#allocation5 + $0xe8] sm:$0xf]
    %v951 = vld [vmem:[#allocation5 + $0xec] sm:$0xf]
    %v952 = vld [vmem:[#allocation5 + $0xf0] sm:$0xf]
    %v953 = vld [vmem:[#allocation5 + $0xf4] sm:$0xf]
    %v954 = vld [vmem:[%s3 + $0x7] sm:$0x1]
    %v955 = vperm.slane %v954, 0
    %v960 = vunpack.c.l.b16 %v950
    %v961 = vunpack.c.l.b16 %v951
    %v962 = vunpack.c.l.b16 %v952
    %v963 = vunpack.c.l.b16 %v953
    %v964 = vpack.c.b16 %v961, %v960
    %v965 = vpack.c.b16 %v963, %v962
    %v969 = vsel %vm348, %v948, 0
    %v972 = vsel %vm348, %v949, 0
    %974 = vmatpush.bf16.msra.mxu0 0
    %975 = vmatpush.bf16.msra.mxu0 0
    %976 = vmatpush.bf16.msra.mxu0 0
    %977 = vmatpush.bf16.msra.mxu0 0
    %978 = vmatpush.bf16.msra.mxu0 0
    %979 = vmatpush.bf16.msra.mxu0 0
    %980 = vmatpush.bf16.msra.mxu0 %v965
    %981 = vmatpush.bf16.msra.mxu0 %v964
    %982 = vmatmul.bf16.gmra.mxu0 %v969
    %v983 = vpop.f32.mrf.mxu0
    %v984 = vadd.f32 %v955, %v983
    %v985 = vpop.f32.mrf.mxu0
    %v986 = vadd.f32 %v955, %v985
    %987 = vmatmul.bf16.gmra.mxu0 %v972
    %v988 = vpop.f32.mrf.mxu0
    %v989 = vadd.f32 %v955, %v988
    %v990 = vpop.f32.mrf.mxu0
    %v991 = vadd.f32 %v955, %v990
    %992 = vdwg.mxu0
    %993 = vst.msk [vmem:[#allocation7] sm:$0xff] %vm348, %v984
    %994 = vst.msk [vmem:[#allocation7 + $0x8] sm:$0xff] %vm348, %v986
    %995 = vst.msk [vmem:[#allocation7 + $0x10] sm:$0xff] %vm348, %v989
    %996 = vst.msk [vmem:[#allocation7 + $0x18] sm:$0xff] %vm348, %v991
    // Predicated region
    $region26: #{forward.1} parent=1 // pred_check
      _
    $region27: #{forward.1} parent=1 // pred_check_branch
      %998 = sbr.rel (0) target = $region29
    $region28: #{forward.1} parent=1 // pred_region
      %1000 = vsyncadd [#allocation4], 0
      %s1001 = sshll.u32 [#allocation7], 4
      %s1002 = int_to_ptr.vmem [resolvable:$true] %s1001
      %s1003 = sshll.u32 %s4, 4
      %s1004 = int_to_ptr.hbm [resolvable:$true] %s1003
      %1009 = dma.vmem_to_hbm [thread:$0]  %s1002, 512, %s1004, [#allocation4], 128, 128, 8
    $region29: #{forward.1} parent=1 // pred_fallthru
      _
    // Predicated region
    $region30: #{forward.1} parent=1 // pred_check
      _
    $region31: #{forward.1} parent=1 // pred_check_branch
      %1011 = sbr.rel (0) target = $region33
    $region32: #{forward.1} parent=1 // pred_region
      %1013 = dma.done [#allocation4], 512
    $region33: #{forward.1} parent=1 // pred_fallthru
      _
    %1014 = vsyncpa [#allocation3], 1
    %1015 = vsyncpa [#allocation6], 1
    %1016 = vsyncpa [#allocation4], 1

</llo_original>
